<compile_context>
chip_gen: v7x
topology: tpu7x:2x2x1
jax: 0.10.0
libtpu: 0.0.40
codegen_flags: <defaults>
</compile_context>

<pallas_src>
import functools

import jax
import jax.numpy as jnp
from jax.experimental import pallas as pl
from jax.experimental.pallas import tpu as pltpu


def _entropy_kernel(x_ref, out_ref, *, ts, valid_s, masked):
    s = pl.program_id(1)

    x = x_ref[...].astype(jnp.float32)                    # (1, C, ts)
    m = jnp.max(x, axis=1, keepdims=True)                 # (1, 1, ts)
    shifted = x - m
    ex = jnp.exp(shifted)
    denom = jnp.sum(ex, axis=1, keepdims=True)            # (1, 1, ts)
    num = jnp.sum(ex * shifted, axis=1, keepdims=True)    # (1, 1, ts)
    # sum_C p*logp == sum_C(ex*shifted)/denom - log(denom)   (exact algebra)
    ent = num / denom - jnp.log(denom)                    # (1, 1, ts)

    if masked:
        # zero the contribution of zero-padded spatial columns
        col = s * ts + jax.lax.broadcasted_iota(jnp.int32, (1, 1, ts), 2)
        ent = jnp.where(col < valid_s, ent, 0.0)

    @pl.when(s == 0)
    def _():
        out_ref[...] = jnp.zeros_like(out_ref)

    out_ref[...] += ent                                   # lane-dense accumulate


def max_entropy_loss(logits, ts_max: int = 2048):
    """logits: (B, C, *spatial) float array. Returns scalar loss (float32)."""
    B, C = logits.shape[0], logits.shape[1]
    x = logits.reshape(B, C, -1)                          # (B, C, S)
    S = x.shape[-1]

    # Lane tile: as large as possible (<= ts_max), multiple of 128, and keeping
    # the double-buffered input block comfortably inside scoped VMEM.
    itemsize = jnp.dtype(x.dtype).itemsize
    ts = min(ts_max, ((S + 127) // 128) * 128)
    vmem_budget = 8 << 20  # bytes allowed for 2x (1, C, ts) input buffers
    max_ts_by_vmem = max(128, ((vmem_budget // (2 * C * itemsize)) // 128) * 128)
    ts = min(ts, max_ts_by_vmem)

    pad = (-S) % ts
    if pad:
        x = jnp.pad(x, ((0, 0), (0, 0), (0, pad)))        # zero pad; masked in kernel
    Sp = x.shape[-1]
    num_s = Sp // ts

    kernel = functools.partial(
        _entropy_kernel, ts=ts, valid_s=S, masked=bool(pad)
    )

    partial = pl.pallas_call(
        kernel,
        out_shape=jax.ShapeDtypeStruct((B, 1, ts), jnp.float32),
        grid_spec=pltpu.PrefetchScalarGridSpec(
            num_scalar_prefetch=0,
            grid=(B, num_s),
            in_specs=[pl.BlockSpec((1, C, ts), lambda b, s: (b, 0, s))],
            out_specs=pl.BlockSpec((1, 1, ts), lambda b, s: (b, 0, 0)),
        ),
        compiler_params=pltpu.CompilerParams(
            dimension_semantics=("parallel", "arbitrary")
        ),
    )(x)

    # Tiny final reduce + mean over the true (unpadded) B*S outside the kernel.
    return jnp.sum(partial) / (B * S)


def _reference(logits):
    x = logits.reshape(logits.shape[0], logits.shape[1], -1)
    p = jax.nn.softmax(x, axis=1)
    logp = jax.nn.log_softmax(x, axis=1)
    return jnp.mean(jnp.sum(p * logp, axis=1))


if __name__ == "__main__":
    key = jax.random.PRNGKey(0)
    # (B, C, H, W) = (2, 4, 16, 16)  ->  S = 256
    x = jax.random.normal(key, (2, 4, 16, 16), dtype=jnp.float32)

    loss = max_entropy_loss(x)
    loss = jax.block_until_ready(loss)

    ref = _reference(x)
    assert jnp.allclose(loss, ref, atol=1e-5, rtol=1e-5), (loss, ref)
    print("KERNEL_OK")
</pallas_src>

<mosaic_0001>
module attributes {stable_mosaic.version = 11 : i64} {
  func.func @_entropy_kernel(%arg0: i32, %arg1: i32, %arg2: memref<1x4x256xf32, #tpu.memory_space<vmem>>, %arg3: memref<1x1x256xf32, #tpu.memory_space<vmem>>) attributes {dimension_semantics = [#tpu.dimension_semantics<parallel>, #tpu.dimension_semantics<arbitrary>], iteration_bounds = array<i64: 2, 1>, scalar_prefetch = 0 : i64, scratch_operands = 0 : i64, tpu.core_type = #tpu.core_type<tc>, window_params = [{transform_indices = @transform_0, window_bounds = array<i64: 1, 4, 256>}, {transform_indices = @transform_1, window_bounds = array<i64: 1, 1, 256>}]} {
    %c0 = arith.constant 0 : index
    %c0_0 = arith.constant 0 : index
    %c0_1 = arith.constant 0 : index
    %0 = vector.load %arg2[%c0, %c0_0, %c0_1] : memref<1x4x256xf32, #tpu.memory_space<vmem>>, vector<1x4x256xf32>
    %cst = arith.constant dense<0xFF800000> : vector<1x256xf32>
    %1 = vector.multi_reduction <maximumf>, %0, %cst [1] : vector<1x4x256xf32> to vector<1x256xf32>
    %2 = vector.shape_cast %1 : vector<1x256xf32> to vector<1x1x256xf32>
    %3 = vector.broadcast %2 : vector<1x1x256xf32> to vector<1x4x256xf32>
    %4 = arith.subf %0, %3 : vector<1x4x256xf32>
    %5 = math.exp %4 : vector<1x4x256xf32>
    %cst_2 = arith.constant dense<0.000000e+00> : vector<1x256xf32>
    %6 = vector.multi_reduction <add>, %5, %cst_2 [1] : vector<1x4x256xf32> to vector<1x256xf32>
    %7 = vector.shape_cast %6 : vector<1x256xf32> to vector<1x1x256xf32>
    %8 = arith.mulf %5, %4 : vector<1x4x256xf32>
    %cst_3 = arith.constant dense<0.000000e+00> : vector<1x256xf32>
    %9 = vector.multi_reduction <add>, %8, %cst_3 [1] : vector<1x4x256xf32> to vector<1x256xf32>
    %10 = vector.shape_cast %9 : vector<1x256xf32> to vector<1x1x256xf32>
    %11 = arith.divf %10, %7 : vector<1x1x256xf32>
    %12 = math.log %7 : vector<1x1x256xf32>
    %13 = arith.subf %11, %12 : vector<1x1x256xf32>
    %c0_i32 = arith.constant 0 : i32
    %14 = arith.cmpi eq, %arg1, %c0_i32 : i32
    %15 = arith.extui %14 : i1 to i32
    %c0_i32_4 = arith.constant 0 : i32
    %16 = arith.cmpi ne, %15, %c0_i32_4 : i32
    scf.if %16 {
      %cst_11 = arith.constant 0.000000e+00 : f32
      %20 = vector.broadcast %cst_11 : f32 to vector<1x1x256xf32>
      %c0_12 = arith.constant 0 : index
      %c0_13 = arith.constant 0 : index
      %c0_14 = arith.constant 0 : index
      %21 = vector.load %arg3[%c0_12, %c0_13, %c0_14] : memref<1x1x256xf32, #tpu.memory_space<vmem>>, vector<1x1x256xf32>
      tpu.vector_store %arg3[%c0_12, %c0_13, %c0_14], %20 {strides = array<i32>} : memref<1x1x256xf32, #tpu.memory_space<vmem>>, vector<1x1x256xf32>,
    } else {
    }
    %c0_5 = arith.constant 0 : index
    %c0_6 = arith.constant 0 : index
    %c0_7 = arith.constant 0 : index
    %17 = vector.load %arg3[%c0_5, %c0_6, %c0_7] : memref<1x1x256xf32, #tpu.memory_space<vmem>>, vector<1x1x256xf32>
    %18 = arith.addf %17, %13 : vector<1x1x256xf32>
    %c0_8 = arith.constant 0 : index
    %c0_9 = arith.constant 0 : index
    %c0_10 = arith.constant 0 : index
    %19 = vector.load %arg3[%c0_8, %c0_9, %c0_10] : memref<1x1x256xf32, #tpu.memory_space<vmem>>, vector<1x1x256xf32>
    tpu.vector_store %arg3[%c0_8, %c0_9, %c0_10], %18 {strides = array<i32>} : memref<1x1x256xf32, #tpu.memory_space<vmem>>, vector<1x1x256xf32>,
    return
  }
  func.func @transform_0(%arg0: i32, %arg1: i32) -> (i32, i32, i32) {
    %c0_i32 = arith.constant 0 : i32
    %c0_i32_0 = arith.constant 0 : i32
    return %arg0, %c0_i32, %arg1 : i32, i32, i32
  }
  func.func @transform_1(%arg0: i32, %arg1: i32) -> (i32, i32, i32) {
    %c0_i32 = arith.constant 0 : i32
    %c0_i32_0 = arith.constant 0 : i32
    %c0_i32_1 = arith.constant 0 : i32
    return %arg0, %c0_i32, %c0_i32_0 : i32, i32, i32
  }
}

</mosaic_0001>

<llo_original>
// kernel: tpu_custom_call.1
$region0: #{tpu_custom_call.1}
  #allocation0 [shape = 'u32[]', space=smem, size = 0x4, offset = 0x4, fixed_abs, tag = 'smem constant byte address 0x4 - core index']
  #allocation1 [shape = 'u32[144,128]{1,0:T(1,128)}', space=vmem, size = 0x12000, scoped, tag = 'internal scratch']
  %s0 = inlined_call_operand.hbm [shape: f32[2,4,256], index: 0, kind: input, shape index: {}]
  %s1 = inlined_call_operand.hbm [shape: f32[2,1,256], index: 1, kind: output, shape index: {}]
  %s2 = sld [smem:[#allocation0]]
  $region45: #{tpu_custom_call.1} parent=0
    _
  %s4 = ssub.s32 1, %s2
  %s5 = scalar_select 0, %s4, %s2
  $region1: #{tpu_custom_call.1} parent=0
    #allocation2 [shape = 'u8[8192]{0}', space=vmem, size = 0x2000, scoped, tag = 'input window, operand 0']
    #allocation3 [shape = 's32[2]{0}', space=sflag, size = 0x8, scoped, tag = 'scoped memory for tpu_custom_call.1']
    #allocation4 [shape = 's32[2]{0}', space=sflag, size = 0x8, scoped, tag = 'scoped memory for tpu_custom_call.1']
    #allocation5 [shape = 'u8[2048]{0}', space=vmem, size = 0x800, scoped, tag = 'output window, operand 0']
    %6 = vsyncpa [#allocation3], 0
    %s7 = scalar_lea.sflag [#allocation3], 1
    %8 = vsyncpa %s7, 0
    %9 = vsyncpa [#allocation4], 0
    %s10 = scalar_lea.sflag [#allocation4], 1
    %11 = vsyncpa %s10, 0
    loop: start=0, step=1, limit=4
    $region2: #{tpu_custom_call.1} parent=1 // loop_pre_header
      _
    $region3: #{tpu_custom_call.1} parent=1 // loop_header
      %s13 = sphi 0, %s17
      %p14 = scmp.ge.s32.totalorder %s13, 4
      %s20 = sphi 0, %s32
      %s21 = sphi 0, %s28
      %s22 = sphi 0, %s20
      %s23 = sphi 0, %s21
      %s24 = sphi 0, %s22
      %s25 = sphi 0, %s23
      %s37 = sphi 0, %s39
      %s40 = sphi 0, %s37
      %s41 = sphi 0, %s40
      %s57 = sphi 0, %s41
      %s63 = sphi 0, %s65
      %s66 = sphi 0, %s63
      %s67 = sphi 0, %s66
      %s83 = sphi 0, %s67
    $region4: #{tpu_custom_call.1} parent=1 // loop_header_branch
      %16 = sbr.rel (%p14) target = $region8
    $region5: #{tpu_custom_call.1} parent=1 // loop_body
      %s18 = ssub.s32 %s13, 1
      %s19 = ssub.s32 %s13, 2
      %s26 = sadd.s32 1, %s21
      %p27 = scmp.ge.s32.totalorder %s26, 1
      %s28 = scalar_select %p27, 0, %s26
      %s29 = sadd.s32 1, %s20
      %s30 = scalar_select %p27, %s29, %s20
      %p31 = scmp.ge.s32.totalorder %s30, 2
      %s32 = scalar_select %p31, 0, %s30
      %s33 = ssub.s32 %s20, %s32
      %s34 = ssub.s32 %s21, %s28
      %s35 = sor.u32 %s33, %s34
      %p36 = scmp.eq.s32.totalorder %s35, 0
      %s38 = sadd.s32 %s37, 1
      %s39 = scalar_select %p36, %s37, %s38
      %p42 = pneg %p36
      %p43 = scmp.eq.s32.totalorder %s13, 1
      %p44 = por %p42, %p43
      %p45 = scmp.ne.s32.totalorder %s37, %s40
      %p46 = scmp.eq.s32.totalorder %s13, 0
      %p47 = por %p45, %p46
      %p48 = scmp.ne.s32.totalorder %s37, %s40
      %p49 = scmp.eq.s32.totalorder %s18, 1
      %p50 = por %p48, %p49
      %p51 = scmp.ne.s32.totalorder %s40, %s41
      %p52 = scmp.eq.s32.totalorder %s18, 0
      %p53 = por %p51, %p52
      %p54 = scmp.ne.s32.totalorder %s40, %s41
      %p55 = scmp.eq.s32.totalorder %s19, 1
      %p56 = por %p54, %p55
      %p58 = scmp.ne.s32.totalorder %s41, %s57
      %p59 = scmp.eq.s32.totalorder %s19, 0
      %p60 = por %p58, %p59
      %s61 = ssub.s32 %s20, %s32
      %p62 = scmp.eq.s32.totalorder %s61, 0
      %s64 = sadd.s32 %s63, 1
      %s65 = scalar_select %p62, %s63, %s64
      %p68 = pneg %p62
      %p69 = scmp.eq.s32.totalorder %s13, 1
      %p70 = por %p68, %p69
      %p71 = scmp.ne.s32.totalorder %s63, %s66
      %p72 = scmp.eq.s32.totalorder %s13, 0
      %p73 = por %p71, %p72
      %p74 = scmp.ne.s32.totalorder %s63, %s66
      %p75 = scmp.eq.s32.totalorder %s18, 1
      %p76 = por %p74, %p75
      %p77 = scmp.ne.s32.totalorder %s66, %s67
      %p78 = scmp.eq.s32.totalorder %s18, 0
      %p79 = por %p77, %p78
      %p80 = scmp.ne.s32.totalorder %s66, %s67
      %p81 = scmp.eq.s32.totalorder %s19, 1
      %p82 = por %p80, %p81
      %p84 = scmp.ne.s32.totalorder %s67, %s83
      %p85 = scmp.eq.s32.totalorder %s19, 0
      %p86 = por %p84, %p85
      %p87 = scmp.le.s32.totalorder 1, %s13
      %p88 = scmp.lt.s32.totalorder %s13, 3
      %p89 = pnand %p87, %p88
      %p90 = pneg %p89
      // Predicated region
      $region9: #{tpu_custom_call.1} parent=5 // pred_check
        _
      $region10: #{tpu_custom_call.1} parent=5 // pred_check_branch
        %92 = sbr.rel (%p89) target = $region12
      $region11: #{tpu_custom_call.1} parent=5 // pred_region
        %s93 = ssub.s32 %s13, 1
      $region12: #{tpu_custom_call.1} parent=5 // pred_fallthru
        _
      %p94 = scmp.lt.s32.totalorder %s13, 2
      // Predicated region
      $region13: #{tpu_custom_call.1} parent=5 // pred_check
        %p95 = pneg %p94
      $region14: #{tpu_custom_call.1} parent=5 // pred_check_branch
        %97 = sbr.rel (%p95) target = $region16
      $region15: #{tpu_custom_call.1} parent=5 // pred_region
        // Predicated region
        $region17: #{tpu_custom_call.1} parent=15 // pred_check
          %p98 = pneg %p47
        $region18: #{tpu_custom_call.1} parent=15 // pred_check_branch
          %100 = sbr.rel (%p98) target = $region20
        $region19: #{tpu_custom_call.1} parent=15 // pred_region
          %s101 = sand.u32 %s37, 1
          %s102 = scalar_lea.sflag [#allocation3], %s101
          %s103 = sand.u32 %s37, 1
          %s104 = smul.addr %s103, 8
          %s105 = scalar_lea.vmem [#allocation2], %s104
          %s106 = smul.u32 2, %s21
          %s108 = ssub.s32 128, 128
          %109 = vsyncadd %s102, %s108
          %s110 = smul.addr %s20, 2
          %s111 = sadd.s32 %s106, %s110
          %s112 = smul.addr %s111, 64
          %s113 = scalar_lea.hbm %s0, %s112
          %s115 = sshll.u32 %s105, 4
          %s116 = int_to_ptr.vmem [resolvable:$true] %s115
          %118 = dma.hbm_to_vmem [thread:$0]  %s113, 128, %s116, %s102
        $region20: #{tpu_custom_call.1} parent=15 // pred_fallthru
          _
      $region16: #{tpu_custom_call.1} parent=5 // pred_fallthru
        _
      %p119 = scmp.le.s32.totalorder 1, %s13
      %p120 = scmp.lt.s32.totalorder %s13, 3
      %p121 = pnand %p119, %p120
      %p122 = pneg %p121
      // Predicated region
      $region21: #{tpu_custom_call.1} parent=5 // pred_check
        _
      $region22: #{tpu_custom_call.1} parent=5 // pred_check_branch
        %124 = sbr.rel (%p121) target = $region24
      $region23: #{tpu_custom_call.1} parent=5 // pred_region
        %s125 = ssub.s32 %s13, 1
        %s126 = sand.u32 %s40, 1
        %s127 = scalar_lea.sflag [#allocation3], %s126
        %s128 = sand.u32 %s40, 1
        %s129 = smul.addr %s128, 8
        %s130 = scalar_lea.vmem [#allocation2], %s129
        // Predicated region
        $region25: #{tpu_custom_call.1} parent=23 // pred_check
          %p131 = pneg %p53
        $region26: #{tpu_custom_call.1} parent=23 // pred_check_branch
          %133 = sbr.rel (%p131) target = $region28
        $region27: #{tpu_custom_call.1} parent=23 // pred_region
          %134 = dma.done %s127, 128
        $region28: #{tpu_custom_call.1} parent=23 // pred_fallthru
          _
        %s135 = sand.u32 %s40, 1
        %s136 = scalar_lea.sflag [#allocation3], %s135
        %s137 = sand.u32 %s40, 1
        %s138 = smul.addr %s137, 8
        %s139 = scalar_lea.vmem [#allocation2], %s138
        %p140 = pneg %p53
        %p141 = pneg %p50
        %p142 = pneg %p79
        %p143 = pneg %p76
        %s144 = sand.u32 %s66, 1
        %s145 = scalar_lea.sflag [#allocation4], %s144
        %s146 = sand.u32 %s66, 1
        %s147 = smul.addr %s146, 2
        %s148 = scalar_lea.vmem [#allocation5], %s147
        %s149 = smul.u32 2, %s23
        %v150 = vld [vmem:[%s130] sm:$0xff]
        %v152 = vcombine.high %v150, %v150
        %vm154 = vcmask 1043456
        %v155 = vsel %vm154, %v150, -inf
        %v156 = vrot.slane %v155, 4
        %v157 = vmax.f32 %v155, %v156
        %v158 = vrot.slane %v157, 2
        %v159 = vmax.f32 %v157, %v158
        %v160 = vrot.slane %v159, 1
        %v161 = vmax.f32 %v159, %v160
        %v162 = vsel %vm154, %v152, -inf
        %v163 = vrot.slane %v162, 4
        %v164 = vmax.f32 %v162, %v163
        %v165 = vrot.slane %v164, 2
        %v166 = vmax.f32 %v164, %v165
        %v167 = vrot.slane %v166, 1
        %v168 = vmax.f32 %v166, %v167
        %v171 = vcombine.low %v161, %v168
        %v173 = vsub.f32 %v150, %v171
        %v174 = vmul.f32 %v173, 1.442695
        %v175 = vpow.pop %v174
        %v177 = vcombine.high %v175, %v175
        %v179 = vsel %vm154, %v175, 0.0
        %v180 = vrot.slane %v179, 4
        %v181 = vadd.f32 %v179, %v180
        %v182 = vrot.slane %v181, 2
        %v183 = vadd.f32 %v181, %v182
        %v184 = vrot.slane %v183, 1
        %v185 = vadd.f32 %v183, %v184
        %v186 = vsel %vm154, %v177, 0.0
        %v187 = vrot.slane %v186, 4
        %v188 = vadd.f32 %v186, %v187
        %v189 = vrot.slane %v188, 2
        %v190 = vadd.f32 %v188, %v189
        %v191 = vrot.slane %v190, 1
        %v192 = vadd.f32 %v190, %v191
        %v193 = vmul.f32 %v175, %v173
        %v195 = vcombine.high %v193, %v193
        %v197 = vsel %vm154, %v193, 0.0
        %v198 = vrot.slane %v197, 4
        %v199 = vadd.f32 %v197, %v198
        %v200 = vrot.slane %v199, 2
        %v201 = vadd.f32 %v199, %v200
        %v202 = vrot.slane %v201, 1
        %v203 = vadd.f32 %v201, %v202
        %v204 = vsel %vm154, %v195, 0.0
        %v205 = vrot.slane %v204, 4
        %v206 = vadd.f32 %v204, %v205
        %v207 = vrot.slane %v206, 2
        %v208 = vadd.f32 %v206, %v207
        %v209 = vrot.slane %v208, 1
        %v210 = vadd.f32 %v208, %v209
        %v211 = vrcp.pop %v185
        %v212 = vmul.f32 %v203, %v211
        %v213 = vrcp.pop %v192
        %v214 = vmul.f32 %v210, %v213
        %v215 = vlog2.pop %v185
        %v216 = vmul.f32 %v215, 0.6931472
        %v217 = vlog2.pop %v192
        %v218 = vmul.f32 %v217, 0.6931472
        %v219 = vsub.f32 %v212, %v216
        %v220 = vsub.f32 %v214, %v218
        %p221 = scmp.eq.s32.totalorder %s23, 0
        // Predicated region
        $region29: #{tpu_custom_call.1} parent=23 // pred_check
          %p222 = pneg %p221
        $region30: #{tpu_custom_call.1} parent=23 // pred_check_branch
          %224 = sbr.rel (%p222) target = $region32
        $region31: #{tpu_custom_call.1} parent=23 // pred_region
          %v225 = vlaneseq
          %vm226 = vcmp.ge.s32.totalorder %v225, 0
          %vm227 = vcmp.lt.s32.totalorder %v225, 256
          %vm228 = vmand %vm226, %vm227
          %229 = vst.msk [vmem:[%s148] sm:$0x3] %vm228, 0.0
        $region32: #{tpu_custom_call.1} parent=23 // pred_fallthru
          _
        %v230 = vld [vmem:[%s148] sm:$0x3]
        %v233 = vcombine.low %v219, %v220
        %v235 = vunpack.c.l.s4 1966171168
        %v236 = vunpack.c.0.s8 %v235
        %v237 = vlaneseq
        %v238 = vshrl.u32 %v237, 7
        %v239 = vsub.s32 %v236, %v238
        %v240 = vrot.slane %v233, %v239
        %v242 = vunpack.c.l.s4 1966171168
        %v243 = vunpack.c.0.s8 %v242
        %v244 = vlaneseq
        %v245 = vshrl.u32 %v244, 7
        %v246 = vsub.s32 %v243, %v245
        %v247 = vrot.slane %v240, %v246
        %v249 = vadd.f32 %v230, %v247
        %v250 = vlaneseq
        %vm251 = vcmp.ge.s32.totalorder %v250, 0
        %vm252 = vcmp.lt.s32.totalorder %v250, 256
        %vm253 = vmand %vm251, %vm252
        %254 = vst.msk [vmem:[%s148] sm:$0x3] %vm253, %v249
        %s255 = sand.u32 %s66, 1
        %s256 = scalar_lea.sflag [#allocation4], %s255
        %s257 = sand.u32 %s66, 1
        %s258 = smul.addr %s257, 2
        %s259 = scalar_lea.vmem [#allocation5], %s258
        // Predicated region
        $region33: #{tpu_custom_call.1} parent=23 // pred_check
          %p260 = pneg %p76
        $region34: #{tpu_custom_call.1} parent=23 // pred_check_branch
          %262 = sbr.rel (%p260) target = $region36
        $region35: #{tpu_custom_call.1} parent=23 // pred_region
          %s264 = ssub.s32 32, 32
          %265 = vsyncadd %s256, %s264
          %s266 = smul.addr %s22, 2
          %s267 = smul.addr %s266, 16
          %s268 = scalar_lea.hbm %s1, %s267
          %s270 = sshll.u32 %s259, 4
          %s271 = int_to_ptr.vmem [resolvable:$true] %s270
          %273 = dma.vmem_to_hbm [thread:$0]  %s271, 32, %s268, %s256
        $region36: #{tpu_custom_call.1} parent=23 // pred_fallthru
          _
      $region24: #{tpu_custom_call.1} parent=5 // pred_fallthru
        _
      %p274 = scmp.le.s32.totalorder 2, %s13
      // Predicated region
      $region37: #{tpu_custom_call.1} parent=5 // pred_check
        %p275 = pneg %p274
      $region38: #{tpu_custom_call.1} parent=5 // pred_check_branch
        %277 = sbr.rel (%p275) target = $region40
      $region39: #{tpu_custom_call.1} parent=5 // pred_region
        %s278 = ssub.s32 %s13, 2
        // Predicated region
        $region41: #{tpu_custom_call.1} parent=39 // pred_check
          %p279 = pneg %p82
        $region42: #{tpu_custom_call.1} parent=39 // pred_check_branch
          %281 = sbr.rel (%p279) target = $region44
        $region43: #{tpu_custom_call.1} parent=39 // pred_region
          %s282 = sand.u32 %s67, 1
          %s283 = scalar_lea.sflag [#allocation4], %s282
          %s284 = sand.u32 %s67, 1
          %s285 = smul.addr %s284, 2
          %s286 = scalar_lea.vmem [#allocation5], %s285
          %287 = dma.done %s283, 32
        $region44: #{tpu_custom_call.1} parent=39 // pred_fallthru
          _
      $region40: #{tpu_custom_call.1} parent=5 // pred_fallthru
        _
    $region6: #{tpu_custom_call.1} parent=1 // loop_footer
      %s17 = sadd.s32 1, %s13
    $region7: #{tpu_custom_call.1} parent=1 // loop_footer_branch
      %12 = sbr.rel target = $region3
    $region8: #{tpu_custom_call.1} parent=1 // loop_exit
      _
    %288 = vsyncpa [#allocation3], 1
    %s289 = scalar_lea.sflag [#allocation3], 1
    %290 = vsyncpa %s289, 1
    %291 = vsyncpa [#allocation4], 1
    %s292 = scalar_lea.sflag [#allocation4], 1
    %293 = vsyncpa %s292, 1

</llo_original>
